<compile_context>
chip_gen: v7x
topology: tpu7x:2x2x1
jax: 0.10.0
libtpu: 0.0.40
codegen_flags: <defaults>
</compile_context>

<pallas_src>
import jax
import jax.numpy as jnp
from jax.experimental import pallas as pl
from jax.experimental.pallas import tpu as pltpu


def _norm_kernel(x_ref, scale_ref, bias_ref, o_ref):
    # x_ref: (BR, L) dense slab.  scale_ref / bias_ref: (BR, 1) per-row params.
    # Single FMA per element; no divide, no cross-lane work.
    x = x_ref[...].astype(jnp.float32)
    o_ref[...] = (x * scale_ref[...] + bias_ref[...]).astype(o_ref.dtype)


def _pick_block(total, max_block, align):
    """Largest b <= max_block with b % align == 0 and total % b == 0.

    Falls back to `total` (the full extent is always a legal block dim)."""
    b = (min(total, max_block) // align) * align
    while b >= align:
        if total % b == 0:
            return b
        b -= align
    return total


def normalized_model_forward(x, mean_value, std_value, out_dtype=None):
    """Pallas equivalent of NormalizedModel.forward.

    x:           (N, C, H, W) input, NCHW as in PyTorch (raw 0..255 pixels).
    mean_value:  (C,) per-channel mean (constructor argument, pre-255 scaling).
    std_value:   (C,) per-channel std  (constructor argument, pre-255 scaling).
    out_dtype:   optional output dtype (e.g. jnp.bfloat16) if the downstream
                 module accepts it; defaults to x.dtype (f32 for int inputs).
    """
    N, C, H, W = x.shape
    hw = H * W
    if out_dtype is None:
        out_dtype = x.dtype if jnp.issubdtype(x.dtype, jnp.floating) else jnp.float32

    # --- fold the PyTorch parameter math (view(1,3,1,1)*255) into scale/bias ---
    mean = jnp.asarray(mean_value, jnp.float32) * 255.0          # (C,)
    std = jnp.asarray(std_value, jnp.float32) * 255.0            # (C,)
    scale_c = 1.0 / std                                          # (C,)
    bias_c = -mean * scale_c                                     # (C,)

    # --- dense 2D re-tiling: (N, C, H, W) -> (rows, L), lane-dense last dim ---
    # L divides H*W and is a 128-multiple when possible, so every row of the
    # flattened slab belongs to exactly one (image, channel) pair.
    L = _pick_block(hw, 4096, 128)            # lane width (falls back to hw)
    P = hw // L                               # rows per (image, channel)
    rows = N * C * P
    x2 = x.reshape(rows, L)

    # Per-row scale / bias (row r -> channel (r // P) % C).  Tiny arrays.
    ch = (jnp.arange(rows) // P) % C
    scale_rows = scale_c[ch][:, None]         # (rows, 1)
    bias_rows = bias_c[ch][:, None]           # (rows, 1)

    # --- row-block size: ~2 MiB of input per block, multiple of 8 sublanes ---
    itemsize = jnp.dtype(x.dtype).itemsize
    target_rows = max(8, (2 << 20) // (L * itemsize))
    BR = _pick_block(rows, target_rows, 8)
    num_blocks = rows // BR

    y2 = pl.pallas_call(
        _norm_kernel,
        out_shape=jax.ShapeDtypeStruct((rows, L), out_dtype),
        grid_spec=pltpu.PrefetchScalarGridSpec(
            num_scalar_prefetch=0,
            grid=(num_blocks,),
            in_specs=[
                pl.BlockSpec((BR, L), lambda i: (i, 0)),
                pl.BlockSpec((BR, 1), lambda i: (i, 0)),
                pl.BlockSpec((BR, 1), lambda i: (i, 0)),
            ],
            out_specs=pl.BlockSpec((BR, L), lambda i: (i, 0)),
        ),
        compiler_params=pltpu.CompilerParams(
            dimension_semantics=("parallel",)),
    )(x2, scale_rows, bias_rows)

    y = y2.reshape(N, C, H, W)

    # TODO(synk): self.module is an external user-supplied network (not defined
    # by this module's __init__); applied as identity here.  Ideally the
    # normalization above is fused into its first kernel instead of being a
    # standalone HBM round trip.
    return y


if __name__ == "__main__":
    key = jax.random.PRNGKey(0)
    N, C, H, W = 2, 3, 16, 16   # module hardcodes 3 channels (view(1,3,1,1))
    # Image-like inputs in [0, 255) as this wrapper expects raw pixel values.
    x = jax.random.uniform(key, (N, C, H, W), dtype=jnp.float32,
                           minval=0.0, maxval=255.0)

    # Deterministic normalization parameters (standard ImageNet values).
    mean_value = jnp.array([0.485, 0.456, 0.406], dtype=jnp.float32)
    std_value = jnp.array([0.229, 0.224, 0.225], dtype=jnp.float32)

    y = normalized_model_forward(x, mean_value, std_value)
    y = jax.block_until_ready(y)

    # Reference check against plain JAX (same math as the PyTorch forward).
    mean_ref = (mean_value * 255.0).reshape(1, C, 1, 1)
    std_ref = (std_value * 255.0).reshape(1, C, 1, 1)
    y_ref = (x - mean_ref) / std_ref
    assert y.shape == (N, C, H, W)
    # Multiply-by-precomputed-reciprocal differs from true division by ~1 ulp.
    assert jnp.allclose(y, y_ref, rtol=1e-5, atol=1e-5)

    print("KERNEL_OK")
</pallas_src>

<mosaic_0001>
module attributes {stable_mosaic.version = 11 : i64} {
  func.func @_norm_kernel(%arg0: i32, %arg1: memref<6x256xf32, #tpu.memory_space<vmem>>, %arg2: memref<6x1xf32, #tpu.memory_space<vmem>>, %arg3: memref<6x1xf32, #tpu.memory_space<vmem>>, %arg4: memref<6x256xf32, #tpu.memory_space<vmem>>) attributes {dimension_semantics = [#tpu.dimension_semantics<parallel>], iteration_bounds = array<i64: 1>, scalar_prefetch = 0 : i64, scratch_operands = 0 : i64, tpu.core_type = #tpu.core_type<tc>, window_params = [{transform_indices = @transform_0, window_bounds = array<i64: 6, 256>}, {transform_indices = @transform_1, window_bounds = array<i64: 6, 1>}, {transform_indices = @transform_2, window_bounds = array<i64: 6, 1>}, {transform_indices = @transform_3, window_bounds = array<i64: 6, 256>}]} {
    %c0 = arith.constant 0 : index
    %c0_0 = arith.constant 0 : index
    %0 = vector.load %arg1[%c0, %c0_0] : memref<6x256xf32, #tpu.memory_space<vmem>>, vector<6x256xf32>
    %c0_1 = arith.constant 0 : index
    %c0_2 = arith.constant 0 : index
    %1 = vector.load %arg2[%c0_1, %c0_2] : memref<6x1xf32, #tpu.memory_space<vmem>>, vector<6x1xf32>
    %2 = vector.broadcast %1 : vector<6x1xf32> to vector<6x256xf32>
    %3 = arith.mulf %0, %2 : vector<6x256xf32>
    %c0_3 = arith.constant 0 : index
    %c0_4 = arith.constant 0 : index
    %4 = vector.load %arg3[%c0_3, %c0_4] : memref<6x1xf32, #tpu.memory_space<vmem>>, vector<6x1xf32>
    %5 = vector.broadcast %4 : vector<6x1xf32> to vector<6x256xf32>
    %6 = arith.addf %3, %5 : vector<6x256xf32>
    %c0_5 = arith.constant 0 : index
    %c0_6 = arith.constant 0 : index
    %7 = vector.load %arg4[%c0_5, %c0_6] : memref<6x256xf32, #tpu.memory_space<vmem>>, vector<6x256xf32>
    tpu.vector_store %arg4[%c0_5, %c0_6], %6 {strides = array<i32>} : memref<6x256xf32, #tpu.memory_space<vmem>>, vector<6x256xf32>,
    return
  }
  func.func @transform_0(%arg0: i32) -> (i32, i32) {
    %c0_i32 = arith.constant 0 : i32
    %c0_i32_0 = arith.constant 0 : i32
    return %arg0, %c0_i32 : i32, i32
  }
  func.func @transform_1(%arg0: i32) -> (i32, i32) {
    %c0_i32 = arith.constant 0 : i32
    %c0_i32_0 = arith.constant 0 : i32
    return %arg0, %c0_i32 : i32, i32
  }
  func.func @transform_2(%arg0: i32) -> (i32, i32) {
    %c0_i32 = arith.constant 0 : i32
    %c0_i32_0 = arith.constant 0 : i32
    return %arg0, %c0_i32 : i32, i32
  }
  func.func @transform_3(%arg0: i32) -> (i32, i32) {
    %c0_i32 = arith.constant 0 : i32
    %c0_i32_0 = arith.constant 0 : i32
    return %arg0, %c0_i32 : i32, i32
  }
}

</mosaic_0001>

<llo_original>
// kernel: tpu_custom_call.1
$region0: #{tpu_custom_call.1}
  #allocation0 [shape = 'u32[]', space=smem, size = 0x4, offset = 0x4, fixed_abs, tag = 'smem constant byte address 0x4 - core index']
  #allocation1 [shape = 'u32[144,128]{1,0:T(1,128)}', space=vmem, size = 0x12000, scoped, tag = 'internal scratch']
  %s0 = inlined_call_operand.vmem [shape: f32[6,256], index: 0, kind: input, shape index: {}]
  %s1 = inlined_call_operand.vmem [shape: f32[6,1], index: 1, kind: input, shape index: {}]
  %s2 = inlined_call_operand.vmem [shape: f32[6,1], index: 2, kind: input, shape index: {}]
  %s3 = inlined_call_operand.hbm [shape: f32[6,256], index: 3, kind: output, shape index: {}]
  %s4 = sld [smem:[#allocation0]]
  $region22: #{tpu_custom_call.1} parent=0
    _
  %s6 = ssub.s32 1, %s4
  %s7 = scalar_select 0, %s6, %s4
  $region1: #{tpu_custom_call.1} parent=0
    #allocation2 [shape = 'u8[8192]{0}', space=vmem, size = 0x2000, scoped, tag = 'output window, operand 0, single buffered']
    #allocation3 [shape = 's32[1]{0}', space=sflag, size = 0x4, scoped, tag = 'scoped memory for tpu_custom_call.1']
    %8 = vsyncpa [#allocation3], 0
    // Predicated region
    $region2: #{tpu_custom_call.1} parent=1 // pred_check
      _
    $region3: #{tpu_custom_call.1} parent=1 // pred_check_branch
      %10 = sbr.rel (0) target = $region5
    $region4: #{tpu_custom_call.1} parent=1 // pred_region
      _
    $region5: #{tpu_custom_call.1} parent=1 // pred_fallthru
      _
    // Predicated region
    $region6: #{tpu_custom_call.1} parent=1 // pred_check
      _
    $region7: #{tpu_custom_call.1} parent=1 // pred_check_branch
      %12 = sbr.rel (0) target = $region9
    $region8: #{tpu_custom_call.1} parent=1 // pred_region
      _
    $region9: #{tpu_custom_call.1} parent=1 // pred_fallthru
      _
    // Predicated region
    $region10: #{tpu_custom_call.1} parent=1 // pred_check
      _
    $region11: #{tpu_custom_call.1} parent=1 // pred_check_branch
      %14 = sbr.rel (0) target = $region13
    $region12: #{tpu_custom_call.1} parent=1 // pred_region
      _
    $region13: #{tpu_custom_call.1} parent=1 // pred_fallthru
      _
    %v15 = vld [vmem:[%s0] sm:$0x3f]
    %v16 = vld [vmem:[%s0 + $0x8] sm:$0x3f]
    %v17 = vld [vmem:[%s1] sm:$0x3f]
    %19 = vset.pattern.permute.xlu0 0
    %20 = vperm.xlu0 %19, %v17
    %v21 = vpop.permute.xlu0 %20
    %v23 = vmul.f32 %v15, %v21
    %v24 = vmul.f32 %v16, %v21
    %v25 = vld [vmem:[%s2] sm:$0x3f]
    %27 = vset.pattern.permute.xlu0 0
    %28 = vperm.xlu0 %27, %v25
    %v29 = vpop.permute.xlu0 %28
    %v31 = vadd.f32 %v23, %v29
    %v32 = vadd.f32 %v24, %v29
    %33 = vst [vmem:[#allocation2] sm:$0x3f] %v31
    %34 = vst [vmem:[#allocation2 + $0x8] sm:$0x3f] %v32
    // Predicated region
    $region14: #{tpu_custom_call.1} parent=1 // pred_check
      _
    $region15: #{tpu_custom_call.1} parent=1 // pred_check_branch
      %36 = sbr.rel (0) target = $region17
    $region16: #{tpu_custom_call.1} parent=1 // pred_region
      %s38 = ssub.s32 256, 256
      %39 = vsyncadd [#allocation3], %s38
      %s41 = sshll.u32 [#allocation2], 4
      %s42 = int_to_ptr.vmem [resolvable:$true] %s41
      %44 = dma.vmem_to_hbm [thread:$0]  %s42, 256, %s3, [#allocation3]
    $region17: #{tpu_custom_call.1} parent=1 // pred_fallthru
      _
    // Predicated region
    $region18: #{tpu_custom_call.1} parent=1 // pred_check
      _
    $region19: #{tpu_custom_call.1} parent=1 // pred_check_branch
      %46 = sbr.rel (0) target = $region21
    $region20: #{tpu_custom_call.1} parent=1 // pred_region
      %47 = dma.done [#allocation3], 256
    $region21: #{tpu_custom_call.1} parent=1 // pred_fallthru
      _
    %48 = vsyncpa [#allocation3], 1

</llo_original>
